<compile_context>
chip_gen: v7x
topology: tpu7x:2x2x1
jax: 0.10.0
libtpu: 0.0.40
codegen_flags: <defaults>
</compile_context>

<pallas_src>
import jax
import jax.numpy as jnp
from jax.experimental import pallas as pl
from jax.experimental.pallas import tpu as pltpu


# Lane-dense last dimension (multiple of 128) and ~2 MiB tile target.
_LANE = 512
_TARGET_TILE_BYTES = 2 * 1024 * 1024


def _copy_kernel(x_ref, o_ref):
    # Full-tile VMEM copy; lane-dense (block_rows, 512) tile -> unmasked vst.
    o_ref[...] = x_ref[...]


def mmkg_decoder_identity_pallas(x: jax.Array) -> jax.Array:
    """Identity pass-through as a lane-dense, large-tile Pallas TPU kernel.

    Accepts any shape/dtype; returns an array identical to `x`.
    (Production identity should just return `x`; this kernel is demonstrative.)
    """
    orig_shape = x.shape
    total = x.size
    itemsize = jnp.dtype(x.dtype).itemsize

    # --- wrapper-side layout plumbing: flatten to a lane-dense 2D slab -------
    lane = _LANE
    rows = -(-total // lane)                       # cdiv(total, lane)

    # Tile rows: aim for ~2 MiB per tile, multiple of 8 (sublane), but never
    # larger than the (8-aligned) row count itself.
    target_rows = max(8, (_TARGET_TILE_BYTES // (lane * itemsize)) // 8 * 8)
    rows_aligned = -(-rows // 8) * 8
    block_rows = min(target_rows, rows_aligned)

    # Pad so block_rows divides the row count exactly (clean, unmasked tiles).
    padded_rows = -(-rows // block_rows) * block_rows
    padded_total = padded_rows * lane

    flat = x.reshape(-1)
    if padded_total != total:
        flat = jnp.pad(flat, (0, padded_total - total))
    x2 = flat.reshape(padded_rows, lane)

    grid = (padded_rows // block_rows,)

    out = pl.pallas_call(
        _copy_kernel,
        out_shape=jax.ShapeDtypeStruct((padded_rows, lane), x.dtype),
        grid_spec=pl.GridSpec(
            grid=grid,
            in_specs=[pl.BlockSpec((block_rows, lane), lambda i: (i, 0))],
            out_specs=pl.BlockSpec((block_rows, lane), lambda i: (i, 0)),
        ),
        compiler_params=pltpu.CompilerParams(
            # Independent blocks: lets v7x shard the grid across its 2 TCs.
            dimension_semantics=("parallel",),
        ),
        cost_estimate=pl.CostEstimate(
            flops=0,
            transcendentals=0,
            bytes_accessed=2 * padded_total * itemsize,
        ),
    )(x2)

    if padded_total != total:
        out = out.reshape(-1)[:total]
    return out.reshape(orig_shape)


class MMKGDecoder:
    """JAX/Pallas mirror of the (empty) PyTorch MMKGDecoder."""

    def __init__(self):
        # Reference __init__ defines no parameters.
        pass

    def forward(self, input):  # noqa: A002 - match reference signature
        # Reference forward body is `pass` -> returns None.  Preserved exactly.
        # TODO(synk): reference forward is a no-op; there is no hot path to
        # translate — the Pallas identity kernel above is a stand-in demo only.
        return None

    __call__ = forward


if __name__ == "__main__":
    key = jax.random.PRNGKey(0)
    x = jax.random.normal(key, (2, 4, 16, 16), dtype=jnp.float32)  # NCHW

    # Run the (demonstrative) Pallas identity kernel once and block on it.
    y = mmkg_decoder_identity_pallas(x)
    y = jax.block_until_ready(y)
    assert y.shape == x.shape and y.dtype == x.dtype
    assert bool(jnp.allclose(y, x))

    # Faithful module semantics: forward returns None, exactly like PyTorch.
    module = MMKGDecoder()
    result = module(x)
    assert result is None

    print("KERNEL_OK")
</pallas_src>

<mosaic_0001>
module attributes {stable_mosaic.version = 11 : i64} {
  func.func @_copy_kernel(%arg0: i32, %arg1: memref<8x512xf32, #tpu.memory_space<vmem>>, %arg2: memref<8x512xf32, #tpu.memory_space<vmem>>) attributes {dimension_semantics = [#tpu.dimension_semantics<parallel>], iteration_bounds = array<i64: 1>, scalar_prefetch = 0 : i64, scratch_operands = 0 : i64, tpu.core_type = #tpu.core_type<tc>, window_params = [{transform_indices = @transform_0, window_bounds = array<i64: 8, 512>}, {transform_indices = @transform_1, window_bounds = array<i64: 8, 512>}]} {
    %c0 = arith.constant 0 : index
    %c0_0 = arith.constant 0 : index
    %0 = vector.load %arg1[%c0, %c0_0] : memref<8x512xf32, #tpu.memory_space<vmem>>, vector<8x512xf32>
    %c0_1 = arith.constant 0 : index
    %c0_2 = arith.constant 0 : index
    %1 = vector.load %arg2[%c0_1, %c0_2] : memref<8x512xf32, #tpu.memory_space<vmem>>, vector<8x512xf32>
    tpu.vector_store %arg2[%c0_1, %c0_2], %0 {strides = array<i32>} : memref<8x512xf32, #tpu.memory_space<vmem>>, vector<8x512xf32>,
    return
  }
  func.func @transform_0(%arg0: i32) -> (i32, i32) {
    %c0_i32 = arith.constant 0 : i32
    %c0_i32_0 = arith.constant 0 : i32
    return %arg0, %c0_i32 : i32, i32
  }
  func.func @transform_1(%arg0: i32) -> (i32, i32) {
    %c0_i32 = arith.constant 0 : i32
    %c0_i32_0 = arith.constant 0 : i32
    return %arg0, %c0_i32 : i32, i32
  }
}

</mosaic_0001>

<llo_original>
// kernel: tpu_custom_call.1
$region0: #{tpu_custom_call.1}
  #allocation0 [shape = 'u32[]', space=smem, size = 0x4, offset = 0x4, fixed_abs, tag = 'smem constant byte address 0x4 - core index']
  #allocation1 [shape = 'u32[144,128]{1,0:T(1,128)}', space=vmem, size = 0x12000, scoped, tag = 'internal scratch']
  %s0 = inlined_call_operand.hbm [shape: f32[8,512], index: 0, kind: input, shape index: {}]
  %s1 = inlined_call_operand.hbm [shape: f32[8,512], index: 1, kind: output, shape index: {}]
  %s2 = sld [smem:[#allocation0]]
  $region18: #{tpu_custom_call.1} parent=0
    _
  %s4 = ssub.s32 1, %s2
  %s5 = scalar_select 0, %s4, %s2
  $region1: #{tpu_custom_call.1} parent=0
    #allocation2 [shape = 'u8[16384]{0}', space=vmem, size = 0x4000, scoped, tag = 'input window, operand 0, single buffered']
    #allocation3 [shape = 's32[1]{0}', space=sflag, size = 0x4, scoped, tag = 'scoped memory for tpu_custom_call.1']
    #allocation4 [shape = 's32[1]{0}', space=sflag, size = 0x4, scoped, tag = 'scoped memory for tpu_custom_call.1']
    #allocation5 [shape = 'u8[16384]{0}', space=vmem, size = 0x4000, scoped, tag = 'output window, operand 0, single buffered']
    %6 = vsyncpa [#allocation3], 0
    %7 = vsyncpa [#allocation4], 0
    // Predicated region
    $region2: #{tpu_custom_call.1} parent=1 // pred_check
      _
    $region3: #{tpu_custom_call.1} parent=1 // pred_check_branch
      %9 = sbr.rel (0) target = $region5
    $region4: #{tpu_custom_call.1} parent=1 // pred_region
      %s11 = ssub.s32 512, 512
      %12 = vsyncadd [#allocation3], %s11
      %s14 = sshll.u32 [#allocation2], 4
      %s15 = int_to_ptr.vmem [resolvable:$true] %s14
      %17 = dma.hbm_to_vmem [thread:$0]  %s0, 512, %s15, [#allocation3]
    $region5: #{tpu_custom_call.1} parent=1 // pred_fallthru
      _
    // Predicated region
    $region6: #{tpu_custom_call.1} parent=1 // pred_check
      _
    $region7: #{tpu_custom_call.1} parent=1 // pred_check_branch
      %19 = sbr.rel (0) target = $region9
    $region8: #{tpu_custom_call.1} parent=1 // pred_region
      %20 = dma.done [#allocation3], 512
    $region9: #{tpu_custom_call.1} parent=1 // pred_fallthru
      _
    %v21 = vld [vmem:[#allocation2] sm:$0xff]
    %v22 = vld [vmem:[#allocation2 + $0x8] sm:$0xff]
    %v23 = vld [vmem:[#allocation2 + $0x10] sm:$0xff]
    %v24 = vld [vmem:[#allocation2 + $0x18] sm:$0xff]
    %25 = vst [vmem:[#allocation5] sm:$0xff] %v21
    %26 = vst [vmem:[#allocation5 + $0x8] sm:$0xff] %v22
    %27 = vst [vmem:[#allocation5 + $0x10] sm:$0xff] %v23
    %28 = vst [vmem:[#allocation5 + $0x18] sm:$0xff] %v24
    // Predicated region
    $region10: #{tpu_custom_call.1} parent=1 // pred_check
      _
    $region11: #{tpu_custom_call.1} parent=1 // pred_check_branch
      %30 = sbr.rel (0) target = $region13
    $region12: #{tpu_custom_call.1} parent=1 // pred_region
      %s32 = ssub.s32 512, 512
      %33 = vsyncadd [#allocation4], %s32
      %s35 = sshll.u32 [#allocation5], 4
      %s36 = int_to_ptr.vmem [resolvable:$true] %s35
      %38 = dma.vmem_to_hbm [thread:$0]  %s36, 512, %s1, [#allocation4]
    $region13: #{tpu_custom_call.1} parent=1 // pred_fallthru
      _
    // Predicated region
    $region14: #{tpu_custom_call.1} parent=1 // pred_check
      _
    $region15: #{tpu_custom_call.1} parent=1 // pred_check_branch
      %40 = sbr.rel (0) target = $region17
    $region16: #{tpu_custom_call.1} parent=1 // pred_region
      %41 = dma.done [#allocation4], 512
    $region17: #{tpu_custom_call.1} parent=1 // pred_fallthru
      _
    %42 = vsyncpa [#allocation3], 1
    %43 = vsyncpa [#allocation4], 1

</llo_original>
